<compile_context>
chip_gen: v6e
topology: v6e:2x2x1
jax: 0.10.0
libtpu: 0.0.40
codegen_flags: <defaults>
</compile_context>

<pallas_src>
import math
from functools import lru_cache

import jax
import jax.numpy as jnp
from jax.experimental import pallas as pl
from jax.experimental.pallas import tpu as pltpu


# --------------------------- hardware introspection ------------------------ #
@lru_cache(maxsize=1)
def _num_tensorcores():
    """Best-effort TensorCores-per-device count (for grid-step heuristics)."""
    try:
        kind = jax.devices()[0].device_kind.lower()
    except Exception:
        return 1
    for tag in ("v7", "7x", "v4"):
        if tag in kind:
            return 2
    return 1


def _pick_tm(M, cores):
    """Largest row tile on 1-TC chips; keep >=2 grid steps on 2-TC chips."""
    cands = (512, 256, 128, 64, 32, 16, 8)
    if cores >= 2:
        for tm in cands:
            if M >= 2 * tm:
                return tm
        return 8
    for tm in cands:
        if M >= tm:
            return tm
    return 8


def _pick_R(NH, Wm, cores):
    """Rows of the (N*Hm) axis per tile for the sub-pixel ConvT kernel.

    R must divide NH; the row tile is R*Wm and must be a multiple of 8 (or the
    full extent).  Returns None if no legal tiling exists (caller falls back).
    """
    divs = [r for r in range(NH, 0, -1) if NH % r == 0]
    legal = [r for r in divs if (r * Wm) % 8 == 0 or r == NH]
    for r in legal:                                   # largest tile first
        if r * Wm <= 512 and (cores < 2 or NH // r >= 2):
            return r
    for r in legal:
        if r * Wm <= 512:
            return r
    for r in legal:
        if r * Wm <= 4096:
            return r
    return None


# ----------------------------- Pallas GEMM kernels -------------------------- #
@lru_cache(maxsize=None)
def _make_gemm_kernel(n_in, has_alpha, has_res, res_sign, clamp, out_dtype_name):
    out_dtype = jnp.dtype(out_dtype_name)

    def kernel(*refs):
        x_refs = refs[:n_in]
        w_refs = refs[n_in:2 * n_in]
        b_ref = refs[2 * n_in]
        idx = 2 * n_in + 1
        a_ref = refs[idx] if has_alpha else None
        idx += int(has_alpha)
        r_ref = refs[idx] if has_res else None
        o_ref = refs[-1]

        # concat-free GEMM: sum over row-chunks of the (conceptual) concat
        acc = jnp.dot(x_refs[0][...], w_refs[0][...],
                      preferred_element_type=jnp.float32)
        for t in range(1, n_in):
            acc = acc + jnp.dot(x_refs[t][...], w_refs[t][...],
                                preferred_element_type=jnp.float32)
        acc = acc + b_ref[...]
        if has_alpha:                       # PReLU (single shared alpha)
            alpha = a_ref[0]
            acc = jnp.where(acc >= 0.0, acc, alpha * acc)
        if has_res:                         # fused block residual (post-act)
            acc = acc + res_sign * r_ref[...].astype(jnp.float32)
        if clamp:
            acc = jnp.clip(acc, 0.0, 1.0)
        o_ref[...] = acc.astype(out_dtype)

    return kernel


def pallas_gemm(xs2d, ws2d, bias, alpha=None, *, clamp=False,
                residual=None, res_sign=1.0, out_dtype=jnp.bfloat16):
    """act(sum_i xs2d[i] @ ws2d[i] + bias) [+ res_sign*residual] [clamp].

    xs2d[i]: (M, K_i) bf16 ; ws2d[i]: (K_i, Nc) bf16 ; bias/alpha: f32.
    Passing several (x, w) pairs fuses a channel concat into the kernel.
    """
    n_in = len(xs2d)
    M = int(xs2d[0].shape[0])
    Nc = int(ws2d[0].shape[1])
    Ktot = sum(int(x.shape[1]) for x in xs2d)

    # Lane-dense output: tiny Cout (e.g. 3) -> 128 (unmasked stores), slice
    # back outside.  64-channel outputs stay at 64 (HBM-write trade-off).
    Ncp = 128 if Nc < 64 else Nc
    cores = _num_tensorcores()
    tm = _pick_tm(M, cores)
    Mp = pl.cdiv(M, tm) * tm

    args, in_specs = [], []
    for x in xs2d:
        x = x.astype(jnp.bfloat16)
        if Mp != M:
            x = jnp.pad(x, ((0, Mp - M), (0, 0)))
        K_i = int(x.shape[1])
        args.append(x)
        in_specs.append(pl.BlockSpec((tm, K_i), lambda i: (i, 0)))
    for w in ws2d:
        w = w.astype(jnp.bfloat16)
        if Ncp != Nc:
            w = jnp.pad(w, ((0, 0), (0, Ncp - Nc)))
        K_i = int(w.shape[0])
        args.append(w)
        in_specs.append(pl.BlockSpec((K_i, Ncp), lambda i: (0, 0)))   # resident
    b = bias.astype(jnp.float32)
    if Ncp != Nc:
        b = jnp.pad(b, (0, Ncp - Nc))
    args.append(b.reshape(1, Ncp))
    in_specs.append(pl.BlockSpec((1, Ncp), lambda i: (0, 0)))

    has_alpha = alpha is not None
    if has_alpha:
        args.append(alpha.reshape(1).astype(jnp.float32))
        in_specs.append(pl.BlockSpec((1,), lambda i: (0,),
                                     memory_space=pltpu.MemorySpace.SMEM))

    has_res = residual is not None
    if has_res:
        r = residual.astype(jnp.bfloat16)
        if r.shape[1] != Ncp:
            r = jnp.pad(r, ((0, 0), (0, Ncp - r.shape[1])))
        if Mp != M:
            r = jnp.pad(r, ((0, Mp - M), (0, 0)))
        args.append(r)
        in_specs.append(pl.BlockSpec((tm, Ncp), lambda i: (i, 0)))

    out_dt = jnp.dtype(out_dtype)
    kernel = _make_gemm_kernel(n_in, has_alpha, has_res, float(res_sign),
                               bool(clamp), out_dt.name)
    cost = pl.CostEstimate(
        flops=int(2 * Mp * Ktot * Ncp),
        transcendentals=0,
        bytes_accessed=int(2 * Mp * Ktot + 2 * Ktot * Ncp
                           + Mp * Ncp * out_dt.itemsize
                           + (2 * Mp * Ncp if has_res else 0)),
    )
    out = pl.pallas_call(
        kernel,
        grid=(Mp // tm,),
        in_specs=in_specs,
        out_specs=pl.BlockSpec((tm, Ncp), lambda i: (i, 0)),
        out_shape=jax.ShapeDtypeStruct((Mp, Ncp), out_dt),
        compiler_params=pltpu.CompilerParams(
            dimension_semantics=("parallel",)),
        cost_estimate=cost,
    )(*args)
    return out[:M, :Nc]


@lru_cache(maxsize=None)
def _make_convt_kernel(R, Wm, s, cout, has_res, res_sign, out_dtype_name):
    """GEMM + in-kernel sub-pixel (pixel shuffle) scatter + fused residual."""
    out_dtype = jnp.dtype(out_dtype_name)
    sc = s * cout

    def kernel(*refs):
        x_ref, w_ref, b_ref, a_ref = refs[0], refs[1], refs[2], refs[3]
        r_ref = refs[4] if has_res else None
        o_ref = refs[-1]

        acc = jnp.dot(x_ref[...], w_ref[...],
                      preferred_element_type=jnp.float32)
        acc = acc + b_ref[...]
        alpha = a_ref[0]
        acc = jnp.where(acc >= 0.0, acc, alpha * acc)          # PReLU
        # In-kernel pixel shuffle:
        #   acc[r*Wm + w, (qy*s + qx)*cout + co] -> o_ref[r, qy, w, qx*cout+co]
        # (static sublane/lane slices + unmasked (Wm, s*cout) stores)
        for qy in range(s):
            slab = acc[:, qy * sc:(qy + 1) * sc]               # (R*Wm, s*cout)
            for r in range(R):
                piece = slab[r * Wm:(r + 1) * Wm, :]
                if has_res:
                    piece = piece + res_sign * r_ref[r, qy, :, :].astype(
                        jnp.float32)
                o_ref[r, qy, :, :] = piece.astype(out_dtype)

    return kernel


def _convt_subpixel(patches, p, N, Hm, Wm, s, residual=None, res_sign=1.0,
                    out_dtype=jnp.bfloat16):
    """Sub-pixel ConvTranspose GEMM with the pixel shuffle fused in-kernel.

    patches: (N*Hm*Wm, T*T*Cin) bf16; p['w2_sub']: (T*T*Cin, s*s*cout).
    Returns the HR NHWC tensor, or None if no legal tiling exists.
    """
    K = int(patches.shape[1])
    ncols = int(p['w2_sub'].shape[1])
    cout = ncols // (s * s)
    sc = s * cout
    NH = N * Hm
    cores = _num_tensorcores()
    R = _pick_R(NH, Wm, cores)
    if R is None:
        return None
    tm = R * Wm

    args = [patches.astype(jnp.bfloat16),
            p['w2_sub'].astype(jnp.bfloat16),
            p['b_sub'].reshape(1, ncols).astype(jnp.float32),
            p['alpha'].reshape(1).astype(jnp.float32)]
    in_specs = [pl.BlockSpec((tm, K), lambda i: (i, 0)),
                pl.BlockSpec((K, ncols), lambda i: (0, 0)),       # resident
                pl.BlockSpec((1, ncols), lambda i: (0, 0)),
                pl.BlockSpec((1,), lambda i: (0,),
                             memory_space=pltpu.MemorySpace.SMEM)]
    has_res = residual is not None
    if has_res:
        # HR NHWC -> (N*Hm, s, Wm, s*cout) is a free (contiguous) reshape.
        r4 = residual.reshape(NH, s, Wm, sc).astype(jnp.bfloat16)
        args.append(r4)
        in_specs.append(pl.BlockSpec((R, s, Wm, sc), lambda i: (i, 0, 0, 0)))

    out_dt = jnp.dtype(out_dtype)
    kernel = _make_convt_kernel(R, Wm, s, cout, has_res, float(res_sign),
                                out_dt.name)
    M = NH * Wm
    cost = pl.CostEstimate(
        flops=int(2 * M * K * ncols),
        transcendentals=0,
        bytes_accessed=int(2 * M * K + 2 * K * ncols
                           + M * ncols * out_dt.itemsize
                           + (2 * M * ncols if has_res else 0)),
    )
    out4 = pl.pallas_call(
        kernel,
        grid=(NH // R,),
        in_specs=in_specs,
        out_specs=pl.BlockSpec((R, s, Wm, sc), lambda i: (i, 0, 0, 0)),
        out_shape=jax.ShapeDtypeStruct((NH, s, Wm, sc), out_dt),
        compiler_params=pltpu.CompilerParams(
            dimension_semantics=("parallel",)),
        cost_estimate=cost,
    )(*args)
    # Free reshape back to HR NHWC.
    return out4.reshape(N, Hm * s, Wm * s, cout)


# ------------------------------ conv wrappers ------------------------------- #
def _im2col_nhwc(x, kh, kw, stride, pad):
    """x: (N,H,W,C) NHWC -> patches (N*Ho*Wo, kh*kw*C), K ordered (ky, kx, C).

    TODO(synk): fuse this into the Pallas kernels (halo DMA / tap grid axis)
    so the patch matrix is never written to HBM.
    """
    N, H, W, C = x.shape
    Ho = (H + 2 * pad - kh) // stride + 1
    Wo = (W + 2 * pad - kw) // stride + 1
    if kh == 1 and kw == 1 and pad == 0 and stride == 1:
        return x.reshape(N * H * W, C), Ho, Wo
    xp = jnp.pad(x, ((0, 0), (pad, pad), (pad, pad), (0, 0)))
    ih = (jnp.arange(Ho) * stride)[:, None] + jnp.arange(kh)[None, :]
    iw = (jnp.arange(Wo) * stride)[:, None] + jnp.arange(kw)[None, :]
    # adjacent advanced indices -> (N, Ho, Wo, kh, kw, C); channels stay minor.
    patches = xp[:, ih[:, None, :, None], iw[None, :, None, :], :]
    return patches.reshape(N * Ho * Wo, kh * kw * C), Ho, Wo


def conv2d(x, p, kh, kw, stride, pad, *, prelu=True, clamp=False,
           residual=None, res_sign=1.0, out_dtype=jnp.bfloat16):
    """NHWC Conv2d (+ PReLU / clamp / fused residual) via im2col GEMM."""
    N = x.shape[0]
    cout = int(p['w2'].shape[1])
    patches, Ho, Wo = _im2col_nhwc(x.astype(jnp.bfloat16), kh, kw, stride, pad)
    res2d = (residual.reshape(N * Ho * Wo, cout)
             if residual is not None else None)
    out2 = pallas_gemm([patches], [p['w2']], p['b'],
                       alpha=(p['alpha'] if prelu else None),
                       clamp=clamp, residual=res2d, res_sign=res_sign,
                       out_dtype=out_dtype)
    return out2.reshape(N, Ho, Wo, cout)


def conv1x1_concat(xs, p, *, out_dtype=jnp.bfloat16):
    """1x1 conv over an implicit channel-concat of xs (concat fused in-kernel)."""
    N, H, W, _ = xs[0].shape
    cout = int(p['w2'].shape[1])
    xs2d, ws2d, off = [], [], 0
    for x in xs:
        c = int(x.shape[-1])
        xs2d.append(x.reshape(N * H * W, c).astype(jnp.bfloat16))
        ws2d.append(p['w2'][off:off + c, :])
        off += c
    out2 = pallas_gemm(xs2d, ws2d, p['b'], alpha=p['alpha'],
                       out_dtype=out_dtype)
    return out2.reshape(N, H, W, cout)


def conv_transpose2d(x, p, k, s, pad, *, residual=None, res_sign=1.0,
                     out_dtype=jnp.bfloat16, force_fallback=False):
    """NHWC ConvTranspose2d + PReLU (PyTorch semantics, output_padding=0).

    Optional fused residual: returns PReLU(convT(x)) + res_sign * residual,
    where residual is an HR NHWC tensor matching the output shape.
    """
    N, H, W, C = x.shape
    if (not force_fallback) and ('w2_sub' in p):
        T = k // s
        a = pad // s
        patches, Hm, Wm = _im2col_nhwc(x.astype(jnp.bfloat16), T, T, 1,
                                       T - 1 - a)
        out = _convt_subpixel(patches, p, N, Hm, Wm, s,
                              residual=residual, res_sign=res_sign,
                              out_dtype=out_dtype)
        if out is not None:
            return out
    # Exact zero-dilation fallback (k % s != 0, pad % s != 0, or no tiling).
    # TODO(synk): per-phase sub-pixel decomposition for upscale 4/8.
    cout = int(p['w2'].shape[1])
    xd = x
    if s > 1:
        xd = jnp.zeros((N, (H - 1) * s + 1, (W - 1) * s + 1, C), x.dtype)
        xd = xd.at[:, ::s, ::s, :].set(x)
    patches, Ho, Wo = _im2col_nhwc(xd.astype(jnp.bfloat16), k, k, 1,
                                   k - 1 - pad)
    out2 = pallas_gemm([patches], [p['w2']], p['b'], alpha=p['alpha'],
                       out_dtype=out_dtype)
    out = out2.reshape(N, Ho, Wo, cout)
    if residual is not None:
        out = (out.astype(jnp.float32)
               + res_sign * residual.astype(jnp.float32)).astype(out_dtype)
    return out


# ------------------------------- DBPN blocks -------------------------------- #
def up_block(x, p, k, s, pd):
    c1 = conv_transpose2d(x, p['conv1'], k, s, pd)
    c2 = conv2d(c1, p['conv2'], k, k, s, pd, residual=x, res_sign=-1.0)
    return conv_transpose2d(c2, p['conv3'], k, s, pd,
                            residual=c1, res_sign=1.0)


def down_block(x, p, k, s, pd):
    c1 = conv2d(x, p['conv1'], k, k, s, pd)
    c2 = conv_transpose2d(c1, p['conv2'], k, s, pd, residual=x, res_sign=-1.0)
    return conv2d(c2, p['conv3'], k, k, s, pd, residual=c1, res_sign=1.0)


def deep_down_block(xs, p, k, s, pd):
    d = conv1x1_concat(xs, p['deep_conv'])
    c1 = conv2d(d, p['conv1'], k, k, s, pd)
    c2 = conv_transpose2d(c1, p['conv2'], k, s, pd, residual=d, res_sign=-1.0)
    return conv2d(c2, p['conv3'], k, k, s, pd, residual=c1, res_sign=1.0)


def deep_up_block(xs, p, k, s, pd):
    d = conv1x1_concat(xs, p['deep_conv'])
    c1 = conv_transpose2d(d, p['conv1'], k, s, pd)
    c2 = conv2d(c1, p['conv2'], k, k, s, pd, residual=d, res_sign=-1.0)
    return conv_transpose2d(c2, p['conv3'], k, s, pd,
                            residual=c1, res_sign=1.0)


def dbpn_forward(params, x_nchw, k, s, pd):
    x = jnp.transpose(x_nchw, (0, 2, 3, 1))                 # NCHW -> NHWC once
    c1 = conv2d(x, params['conv1'], 3, 3, 1, 1)
    c2 = conv2d(c1, params['conv2'], 1, 1, 1, 0)
    outs = []
    for _ in range(3):
        ub1 = up_block(c2, params['up_block1'], k, s, pd)
        db1 = down_block(ub1, params['down_block1'], k, s, pd)
        ub2 = up_block(db1, params['up_block2'], k, s, pd)
        cat1 = [ub2, ub1]                      # concats are never materialized
        ddb1 = deep_down_block(cat1, params['ddb1'], k, s, pd)
        cat2 = [ddb1, db1]
        dub1 = deep_up_block(cat2, params['dub1'], k, s, pd)
        cat3 = [dub1] + cat1
        ddb2 = deep_down_block(cat3, params['ddb2'], k, s, pd)
        cat4 = [ddb2] + cat2
        dub2 = deep_up_block(cat4, params['dub2'], k, s, pd)
        cat5 = [dub2] + cat3
        ddb3 = deep_down_block(cat5, params['ddb3'], k, s, pd)
        cat6 = [ddb3] + cat4
        dub3 = deep_up_block(cat6, params['dub3'], k, s, pd)
        cat7 = [dub3] + cat5
        ddb4 = deep_down_block(cat7, params['ddb4'], k, s, pd)
        cat8 = [ddb4] + cat6
        dub4 = deep_up_block(cat8, params['dub4'], k, s, pd)
        cat9 = [dub4] + cat7
        ddb5 = deep_down_block(cat9, params['ddb5'], k, s, pd)
        cat10 = [ddb5] + cat8
        dub5 = deep_up_block(cat10, params['dub5'], k, s, pd)
        outs.append(dub5)
    out = jnp.concatenate(outs, axis=-1)                    # (N, H*, W*, 192)
    out = conv2d(out, params['conv3'], 3, 3, 1, 1,
                 prelu=False, clamp=True, out_dtype=jnp.float32)
    return jnp.transpose(out, (0, 3, 1, 2))                 # back to NCHW


# --------------------- param init + GEMM-layout preparation ----------------- #
def _pack_conv_weight(w):
    """(cout, cin, kh, kw) -> GEMM layout (kh*kw*cin, cout) bf16."""
    cout, cin, kh, kw = w.shape
    return w.transpose(2, 3, 1, 0).reshape(kh * kw * cin, cout).astype(
        jnp.bfloat16)


def _prep_conv(key, cin, cout, kk):
    std = 0.5 / math.sqrt(cin * kk * kk)
    w = jax.random.normal(key, (cout, cin, kk, kk), jnp.float32) * std
    return {'w2': _pack_conv_weight(w),
            'b': jnp.zeros((cout,), jnp.float32),
            'alpha': jnp.full((1,), 0.25, jnp.float32)}   # nn.PReLU() default


def _pack_convt(wt, b, alpha, kk, s, pd):
    """PyTorch ConvTranspose2d weight (cin, cout, k, k) -> GEMM layouts."""
    cin, cout = wt.shape[0], wt.shape[1]
    # zero-dilation layout: spatially flipped kernel, rows ordered (ky, kx, ci)
    wc = jnp.flip(wt, axis=(2, 3)).transpose(2, 3, 0, 1)
    p = {'w2': wc.reshape(kk * kk * cin, cout).astype(jnp.bfloat16),
         'b': b.astype(jnp.float32),
         'alpha': alpha.astype(jnp.float32)}
    if s > 1 and kk % s == 0 and pd % s == 0:
        # sub-pixel layout: W_sub[(ty,tx,ci),(qy,qx,co)]
        #   = wt[ci, co, s*(T-1-ty)+qy, s*(T-1-tx)+qx]
        T = kk // s
        w6 = wt.reshape(cin, cout, T, s, T, s)
        w6 = jnp.flip(w6, axis=(2, 4))                     # reverse tap order
        w6 = w6.transpose(2, 4, 0, 3, 5, 1)                # (ty,tx,ci,qy,qx,co)
        p['w2_sub'] = w6.reshape(T * T * cin, s * s * cout).astype(jnp.bfloat16)
        p['b_sub'] = jnp.tile(b.astype(jnp.float32), s * s)
    return p


def _prep_convt(key, cin, cout, kk, s, pd):
    std = 0.5 / math.sqrt(cin * kk * kk)
    wt = jax.random.normal(key, (cin, cout, kk, kk), jnp.float32) * std
    return _pack_convt(wt, jnp.zeros((cout,), jnp.float32),
                       jnp.full((1,), 0.25, jnp.float32), kk, s, pd)


def init_dbpn_params(key, upscale_factor=2):
    if upscale_factor == 2:
        k, s, pd = 6, 2, 2
    elif upscale_factor == 4:
        k, s, pd = 8, 4, 2
    elif upscale_factor == 8:
        k, s, pd = 12, 8, 2
    else:
        raise ValueError("unsupported upscale_factor")
    keys = iter(jax.random.split(key, 64))
    C = 64

    def up_p():
        return {'conv1': _prep_convt(next(keys), C, C, k, s, pd),
                'conv2': _prep_conv(next(keys), C, C, k),
                'conv3': _prep_convt(next(keys), C, C, k, s, pd)}

    def down_p():
        return {'conv1': _prep_conv(next(keys), C, C, k),
                'conv2': _prep_convt(next(keys), C, C, k, s, pd),
                'conv3': _prep_conv(next(keys), C, C, k)}

    def deep_down_p(ns):
        return {'deep_conv': _prep_conv(next(keys), C * ns, C, 1), **down_p()}

    def deep_up_p(ns):
        return {'deep_conv': _prep_conv(next(keys), C * ns, C, 1), **up_p()}

    params = {
        'conv1': _prep_conv(next(keys), 3, 256, 3),
        'conv2': _prep_conv(next(keys), 256, C, 1),
        'up_block1': up_p(),
        'down_block1': down_p(),
        'up_block2': up_p(),
        'ddb1': deep_down_p(2), 'dub1': deep_up_p(2),
        'ddb2': deep_down_p(3), 'dub2': deep_up_p(3),
        'ddb3': deep_down_p(4), 'dub3': deep_up_p(4),
        'ddb4': deep_down_p(5), 'dub4': deep_up_p(5),
        'ddb5': deep_down_p(6), 'dub5': deep_up_p(6),
        'conv3': _prep_conv(next(keys), 192, 3, 3),
    }
    return params, (k, s, pd)


# ---------------------------------- main ------------------------------------ #
if __name__ == "__main__":
    key = jax.random.PRNGKey(0)
    pkey, xkey, wkey, ikey = jax.random.split(key, 4)
    params, (k, s, pd) = init_dbpn_params(pkey, upscale_factor=2)

    # Numeric self-check of the sub-pixel ConvTranspose path (weight prep +
    # in-kernel pixel shuffle + fused epilogue) against the definitional
    # zero-dilation implementation, using a non-symmetric random kernel.
    wt = jax.random.normal(wkey, (64, 64, k, k), jnp.float32) * 0.05
    bchk = jax.random.normal(jax.random.fold_in(wkey, 1), (64,),
                             jnp.float32) * 0.1
    p_chk = _pack_convt(wt, bchk, jnp.full((1,), 0.25, jnp.float32), k, s, pd)
    x_chk = jax.random.uniform(ikey, (1, 8, 8, 64), jnp.float32) - 0.5
    y_sub = conv_transpose2d(x_chk, p_chk, k, s, pd)
    y_dil = conv_transpose2d(x_chk, p_chk, k, s, pd, force_fallback=True)
    assert y_sub.shape == y_dil.shape == (1, 16, 16, 64)
    assert jnp.allclose(y_sub.astype(jnp.float32), y_dil.astype(jnp.float32),
                        atol=2e-2, rtol=2e-2), "sub-pixel ConvT mismatch"

    # Full forward: batch=2, 3 channels, 8x8 LR  ->  (2, 3, 16, 16) SR.
    x = jax.random.uniform(xkey, (2, 3, 8, 8), dtype=jnp.float32)
    fwd = jax.jit(lambda prm, inp: dbpn_forward(prm, inp, k, s, pd))
    out = jax.block_until_ready(fwd(params, x))

    assert out.shape == (2, 3, 16, 16), out.shape
    assert bool(jnp.all(jnp.isfinite(out)))
    assert bool(jnp.all(out >= 0.0)) and bool(jnp.all(out <= 1.0))
    print("KERNEL_OK")
</pallas_src>

<mosaic_0001>
module attributes {stable_mosaic.version = 11 : i64} {
  func.func @kernel(%arg0: i32, %arg1: memref<64x576xbf16, #tpu.memory_space<vmem>>, %arg2: memref<576x256xbf16, #tpu.memory_space<vmem>>, %arg3: memref<1x256xf32, #tpu.memory_space<vmem>>, %arg4: memref<1xf32, #tpu.memory_space<smem>>, %arg5: memref<8x2x8x128xbf16, #tpu.memory_space<vmem>>) attributes {dimension_semantics = [#tpu.dimension_semantics<parallel>], iteration_bounds = array<i64: 1>, scalar_prefetch = 0 : i64, scratch_operands = 0 : i64, tpu.core_type = #tpu.core_type<tc>, window_params = [{transform_indices = @transform_0, window_bounds = array<i64: 64, 576>}, {pipeline_mode = #tpu.pipeline_mode<synchronous>, transform_indices = @transform_1, window_bounds = array<i64: 576, 256>}, {pipeline_mode = #tpu.pipeline_mode<synchronous>, transform_indices = @transform_2, window_bounds = array<i64: 1, 256>}, {transform_indices = @transform_3, window_bounds = array<i64: 1>}, {transform_indices = @transform_4, window_bounds = array<i64: 8, 2, 8, 128>}]} {
    %c0 = arith.constant 0 : index
    %c0_0 = arith.constant 0 : index
    %0 = vector.load %arg1[%c0, %c0_0] : memref<64x576xbf16, #tpu.memory_space<vmem>>, vector<64x576xbf16>
    %c0_1 = arith.constant 0 : index
    %c0_2 = arith.constant 0 : index
    %1 = vector.load %arg2[%c0_1, %c0_2] : memref<576x256xbf16, #tpu.memory_space<vmem>>, vector<576x256xbf16>
    %cst = arith.constant dense<0.000000e+00> : vector<64x256xf32>
    %2 = tpu.matmul %0, %1, %cst {dimension_numbers = #tpu.dot_dimension_numbers<[1], [0], [0], [1], [0, 0, 1, 1], [], []>} : vector<64x576xbf16>, vector<576x256xbf16>, vector<64x256xf32> -> vector<64x256xf32>
    %c0_3 = arith.constant 0 : index
    %c0_4 = arith.constant 0 : index
    %3 = vector.load %arg3[%c0_3, %c0_4] : memref<1x256xf32, #tpu.memory_space<vmem>>, vector<1x256xf32>
    %4 = vector.broadcast %3 : vector<1x256xf32> to vector<64x256xf32>
    %5 = arith.addf %2, %4 : vector<64x256xf32>
    %c0_5 = arith.constant 0 : index
    %6 = memref.load %arg4[%c0_5] : memref<1xf32, #tpu.memory_space<smem>>
    %cst_6 = arith.constant 0.000000e+00 : f32
    %7 = vector.broadcast %cst_6 : f32 to vector<64x256xf32>
    %8 = arith.cmpf oge, %5, %7 : vector<64x256xf32>
    %9 = vector.broadcast %6 : f32 to vector<64x256xf32>
    %10 = arith.mulf %9, %5 : vector<64x256xf32>
    %11 = arith.select %8, %5, %10 : vector<64x256xi1>, vector<64x256xf32>
    %12 = vector.extract_strided_slice %11 {offsets = [0, 0], sizes = [64, 128], strides = [1, 1]} : vector<64x256xf32> to vector<64x128xf32>
    %13 = vector.extract_strided_slice %12 {offsets = [0, 0], sizes = [8, 128], strides = [1, 1]} : vector<64x128xf32> to vector<8x128xf32>
    %14 = arith.truncf %13 : vector<8x128xf32> to vector<8x128xbf16>
    %c0_7 = arith.constant 0 : index
    %c0_8 = arith.constant 0 : index
    %c0_9 = arith.constant 0 : index
    %c0_10 = arith.constant 0 : index
    %15 = vector.load %arg5[%c0_7, %c0_8, %c0_9, %c0_10] : memref<8x2x8x128xbf16, #tpu.memory_space<vmem>>, vector<1x1x8x128xbf16>
    %16 = vector.shape_cast %15 : vector<1x1x8x128xbf16> to vector<8x128xbf16>
    %17 = vector.shape_cast %14 : vector<8x128xbf16> to vector<1x1x8x128xbf16>
    tpu.vector_store %arg5[%c0_7, %c0_8, %c0_9, %c0_10], %17 {strides = array<i32>} : memref<8x2x8x128xbf16, #tpu.memory_space<vmem>>, vector<1x1x8x128xbf16>,
    %18 = vector.extract_strided_slice %12 {offsets = [8, 0], sizes = [8, 128], strides = [1, 1]} : vector<64x128xf32> to vector<8x128xf32>
    %19 = arith.truncf %18 : vector<8x128xf32> to vector<8x128xbf16>
    %c1 = arith.constant 1 : index
    %c0_11 = arith.constant 0 : index
    %c0_12 = arith.constant 0 : index
    %c0_13 = arith.constant 0 : index
    %20 = vector.load %arg5[%c1, %c0_11, %c0_12, %c0_13] : memref<8x2x8x128xbf16, #tpu.memory_space<vmem>>, vector<1x1x8x128xbf16>
    %21 = vector.shape_cast %20 : vector<1x1x8x128xbf16> to vector<8x128xbf16>
    %22 = vector.shape_cast %19 : vector<8x128xbf16> to vector<1x1x8x128xbf16>
    tpu.vector_store %arg5[%c1, %c0_11, %c0_12, %c0_13], %22 {strides = array<i32>} : memref<8x2x8x128xbf16, #tpu.memory_space<vmem>>, vector<1x1x8x128xbf16>,
    %23 = vector.extract_strided_slice %12 {offsets = [16, 0], sizes = [8, 128], strides = [1, 1]} : vector<64x128xf32> to vector<8x128xf32>
    %24 = arith.truncf %23 : vector<8x128xf32> to vector<8x128xbf16>
    %c2 = arith.constant 2 : index
    %c0_14 = arith.constant 0 : index
    %c0_15 = arith.constant 0 : index
    %c0_16 = arith.constant 0 : index
    %25 = vector.load %arg5[%c2, %c0_14, %c0_15, %c0_16] : memref<8x2x8x128xbf16, #tpu.memory_space<vmem>>, vector<1x1x8x128xbf16>
    %26 = vector.shape_cast %25 : vector<1x1x8x128xbf16> to vector<8x128xbf16>
    %27 = vector.shape_cast %24 : vector<8x128xbf16> to vector<1x1x8x128xbf16>
    tpu.vector_store %arg5[%c2, %c0_14, %c0_15, %c0_16], %27 {strides = array<i32>} : memref<8x2x8x128xbf16, #tpu.memory_space<vmem>>, vector<1x1x8x128xbf16>,
    %28 = vector.extract_strided_slice %12 {offsets = [24, 0], sizes = [8, 128], strides = [1, 1]} : vector<64x128xf32> to vector<8x128xf32>
    %29 = arith.truncf %28 : vector<8x128xf32> to vector<8x128xbf16>
    %c3 = arith.constant 3 : index
    %c0_17 = arith.constant 0 : index
    %c0_18 = arith.constant 0 : index
    %c0_19 = arith.constant 0 : index
    %30 = vector.load %arg5[%c3, %c0_17, %c0_18, %c0_19] : memref<8x2x8x128xbf16, #tpu.memory_space<vmem>>, vector<1x1x8x128xbf16>
    %31 = vector.shape_cast %30 : vector<1x1x8x128xbf16> to vector<8x128xbf16>
    %32 = vector.shape_cast %29 : vector<8x128xbf16> to vector<1x1x8x128xbf16>
    tpu.vector_store %arg5[%c3, %c0_17, %c0_18, %c0_19], %32 {strides = array<i32>} : memref<8x2x8x128xbf16, #tpu.memory_space<vmem>>, vector<1x1x8x128xbf16>,
    %33 = vector.extract_strided_slice %12 {offsets = [32, 0], sizes = [8, 128], strides = [1, 1]} : vector<64x128xf32> to vector<8x128xf32>
    %34 = arith.truncf %33 : vector<8x128xf32> to vector<8x128xbf16>
    %c4 = arith.constant 4 : index
    %c0_20 = arith.constant 0 : index
    %c0_21 = arith.constant 0 : index
    %c0_22 = arith.constant 0 : index
    %35 = vector.load %arg5[%c4, %c0_20, %c0_21, %c0_22] : memref<8x2x8x128xbf16, #tpu.memory_space<vmem>>, vector<1x1x8x128xbf16>
    %36 = vector.shape_cast %35 : vector<1x1x8x128xbf16> to vector<8x128xbf16>
    %37 = vector.shape_cast %34 : vector<8x128xbf16> to vector<1x1x8x128xbf16>
    tpu.vector_store %arg5[%c4, %c0_20, %c0_21, %c0_22], %37 {strides = array<i32>} : memref<8x2x8x128xbf16, #tpu.memory_space<vmem>>, vector<1x1x8x128xbf16>,
    %38 = vector.extract_strided_slice %12 {offsets = [40, 0], sizes = [8, 128], strides = [1, 1]} : vector<64x128xf32> to vector<8x128xf32>
    %39 = arith.truncf %38 : vector<8x128xf32> to vector<8x128xbf16>
    %c5 = arith.constant 5 : index
    %c0_23 = arith.constant 0 : index
    %c0_24 = arith.constant 0 : index
    %c0_25 = arith.constant 0 : index
    %40 = vector.load %arg5[%c5, %c0_23, %c0_24, %c0_25] : memref<8x2x8x128xbf16, #tpu.memory_space<vmem>>, vector<1x1x8x128xbf16>
    %41 = vector.shape_cast %40 : vector<1x1x8x128xbf16> to vector<8x128xbf16>
    %42 = vector.shape_cast %39 : vector<8x128xbf16> to vector<1x1x8x128xbf16>
    tpu.vector_store %arg5[%c5, %c0_23, %c0_24, %c0_25], %42 {strides = array<i32>} : memref<8x2x8x128xbf16, #tpu.memory_space<vmem>>, vector<1x1x8x128xbf16>,
    %43 = vector.extract_strided_slice %12 {offsets = [48, 0], sizes = [8, 128], strides = [1, 1]} : vector<64x128xf32> to vector<8x128xf32>
    %44 = arith.truncf %43 : vector<8x128xf32> to vector<8x128xbf16>
    %c6 = arith.constant 6 : index
    %c0_26 = arith.constant 0 : index
    %c0_27 = arith.constant 0 : index
    %c0_28 = arith.constant 0 : index
    %45 = vector.load %arg5[%c6, %c0_26, %c0_27, %c0_28] : memref<8x2x8x128xbf16, #tpu.memory_space<vmem>>, vector<1x1x8x128xbf16>
    %46 = vector.shape_cast %45 : vector<1x1x8x128xbf16> to vector<8x128xbf16>
    %47 = vector.shape_cast %44 : vector<8x128xbf16> to vector<1x1x8x128xbf16>
    tpu.vector_store %arg5[%c6, %c0_26, %c0_27, %c0_28], %47 {strides = array<i32>} : memref<8x2x8x128xbf16, #tpu.memory_space<vmem>>, vector<1x1x8x128xbf16>,
    %48 = vector.extract_strided_slice %12 {offsets = [56, 0], sizes = [8, 128], strides = [1, 1]} : vector<64x128xf32> to vector<8x128xf32>
    %49 = arith.truncf %48 : vector<8x128xf32> to vector<8x128xbf16>
    %c7 = arith.constant 7 : index
    %c0_29 = arith.constant 0 : index
    %c0_30 = arith.constant 0 : index
    %c0_31 = arith.constant 0 : index
    %50 = vector.load %arg5[%c7, %c0_29, %c0_30, %c0_31] : memref<8x2x8x128xbf16, #tpu.memory_space<vmem>>, vector<1x1x8x128xbf16>
    %51 = vector.shape_cast %50 : vector<1x1x8x128xbf16> to vector<8x128xbf16>
    %52 = vector.shape_cast %49 : vector<8x128xbf16> to vector<1x1x8x128xbf16>
    tpu.vector_store %arg5[%c7, %c0_29, %c0_30, %c0_31], %52 {strides = array<i32>} : memref<8x2x8x128xbf16, #tpu.memory_space<vmem>>, vector<1x1x8x128xbf16>,
    %53 = vector.extract_strided_slice %11 {offsets = [0, 128], sizes = [64, 128], strides = [1, 1]} : vector<64x256xf32> to vector<64x128xf32>
    %54 = vector.extract_strided_slice %53 {offsets = [0, 0], sizes = [8, 128], strides = [1, 1]} : vector<64x128xf32> to vector<8x128xf32>
    %55 = arith.truncf %54 : vector<8x128xf32> to vector<8x128xbf16>
    %c0_32 = arith.constant 0 : index
    %c1_33 = arith.constant 1 : index
    %c0_34 = arith.constant 0 : index
    %c0_35 = arith.constant 0 : index
    %56 = vector.load %arg5[%c0_32, %c1_33, %c0_34, %c0_35] : memref<8x2x8x128xbf16, #tpu.memory_space<vmem>>, vector<1x1x8x128xbf16>
    %57 = vector.shape_cast %56 : vector<1x1x8x128xbf16> to vector<8x128xbf16>
    %58 = vector.shape_cast %55 : vector<8x128xbf16> to vector<1x1x8x128xbf16>
    tpu.vector_store %arg5[%c0_32, %c1_33, %c0_34, %c0_35], %58 {strides = array<i32>} : memref<8x2x8x128xbf16, #tpu.memory_space<vmem>>, vector<1x1x8x128xbf16>,
    %59 = vector.extract_strided_slice %53 {offsets = [8, 0], sizes = [8, 128], strides = [1, 1]} : vector<64x128xf32> to vector<8x128xf32>
    %60 = arith.truncf %59 : vector<8x128xf32> to vector<8x128xbf16>
    %c1_36 = arith.constant 1 : index
    %c1_37 = arith.constant 1 : index
    %c0_38 = arith.constant 0 : index
    %c0_39 = arith.constant 0 : index
    %61 = vector.load %arg5[%c1_36, %c1_37, %c0_38, %c0_39] : memref<8x2x8x128xbf16, #tpu.memory_space<vmem>>, vector<1x1x8x128xbf16>
    %62 = vector.shape_cast %61 : vector<1x1x8x128xbf16> to vector<8x128xbf16>
    %63 = vector.shape_cast %60 : vector<8x128xbf16> to vector<1x1x8x128xbf16>
    tpu.vector_store %arg5[%c1_36, %c1_37, %c0_38, %c0_39], %63 {strides = array<i32>} : memref<8x2x8x128xbf16, #tpu.memory_space<vmem>>, vector<1x1x8x128xbf16>,
    %64 = vector.extract_strided_slice %53 {offsets = [16, 0], sizes = [8, 128], strides = [1, 1]} : vector<64x128xf32> to vector<8x128xf32>
    %65 = arith.truncf %64 : vector<8x128xf32> to vector<8x128xbf16>
    %c2_40 = arith.constant 2 : index
    %c1_41 = arith.constant 1 : index
    %c0_42 = arith.constant 0 : index
    %c0_43 = arith.constant 0 : index
    %66 = vector.load %arg5[%c2_40, %c1_41, %c0_42, %c0_43] : memref<8x2x8x128xbf16, #tpu.memory_space<vmem>>, vector<1x1x8x128xbf16>
    %67 = vector.shape_cast %66 : vector<1x1x8x128xbf16> to vector<8x128xbf16>
    %68 = vector.shape_cast %65 : vector<8x128xbf16> to vector<1x1x8x128xbf16>
    tpu.vector_store %arg5[%c2_40, %c1_41, %c0_42, %c0_43], %68 {strides = array<i32>} : memref<8x2x8x128xbf16, #tpu.memory_space<vmem>>, vector<1x1x8x128xbf16>,
    %69 = vector.extract_strided_slice %53 {offsets = [24, 0], sizes = [8, 128], strides = [1, 1]} : vector<64x128xf32> to vector<8x128xf32>
    %70 = arith.truncf %69 : vector<8x128xf32> to vector<8x128xbf16>
    %c3_44 = arith.constant 3 : index
    %c1_45 = arith.constant 1 : index
    %c0_46 = arith.constant 0 : index
    %c0_47 = arith.constant 0 : index
    %71 = vector.load %arg5[%c3_44, %c1_45, %c0_46, %c0_47] : memref<8x2x8x128xbf16, #tpu.memory_space<vmem>>, vector<1x1x8x128xbf16>
    %72 = vector.shape_cast %71 : vector<1x1x8x128xbf16> to vector<8x128xbf16>
    %73 = vector.shape_cast %70 : vector<8x128xbf16> to vector<1x1x8x128xbf16>
    tpu.vector_store %arg5[%c3_44, %c1_45, %c0_46, %c0_47], %73 {strides = array<i32>} : memref<8x2x8x128xbf16, #tpu.memory_space<vmem>>, vector<1x1x8x128xbf16>,
    %74 = vector.extract_strided_slice %53 {offsets = [32, 0], sizes = [8, 128], strides = [1, 1]} : vector<64x128xf32> to vector<8x128xf32>
    %75 = arith.truncf %74 : vector<8x128xf32> to vector<8x128xbf16>
    %c4_48 = arith.constant 4 : index
    %c1_49 = arith.constant 1 : index
    %c0_50 = arith.constant 0 : index
    %c0_51 = arith.constant 0 : index
    %76 = vector.load %arg5[%c4_48, %c1_49, %c0_50, %c0_51] : memref<8x2x8x128xbf16, #tpu.memory_space<vmem>>, vector<1x1x8x128xbf16>
    %77 = vector.shape_cast %76 : vector<1x1x8x128xbf16> to vector<8x128xbf16>
    %78 = vector.shape_cast %75 : vector<8x128xbf16> to vector<1x1x8x128xbf16>
    tpu.vector_store %arg5[%c4_48, %c1_49, %c0_50, %c0_51], %78 {strides = array<i32>} : memref<8x2x8x128xbf16, #tpu.memory_space<vmem>>, vector<1x1x8x128xbf16>,
    %79 = vector.extract_strided_slice %53 {offsets = [40, 0], sizes = [8, 128], strides = [1, 1]} : vector<64x128xf32> to vector<8x128xf32>
    %80 = arith.truncf %79 : vector<8x128xf32> to vector<8x128xbf16>
    %c5_52 = arith.constant 5 : index
    %c1_53 = arith.constant 1 : index
    %c0_54 = arith.constant 0 : index
    %c0_55 = arith.constant 0 : index
    %81 = vector.load %arg5[%c5_52, %c1_53, %c0_54, %c0_55] : memref<8x2x8x128xbf16, #tpu.memory_space<vmem>>, vector<1x1x8x128xbf16>
    %82 = vector.shape_cast %81 : vector<1x1x8x128xbf16> to vector<8x128xbf16>
    %83 = vector.shape_cast %80 : vector<8x128xbf16> to vector<1x1x8x128xbf16>
    tpu.vector_store %arg5[%c5_52, %c1_53, %c0_54, %c0_55], %83 {strides = array<i32>} : memref<8x2x8x128xbf16, #tpu.memory_space<vmem>>, vector<1x1x8x128xbf16>,
    %84 = vector.extract_strided_slice %53 {offsets = [48, 0], sizes = [8, 128], strides = [1, 1]} : vector<64x128xf32> to vector<8x128xf32>
    %85 = arith.truncf %84 : vector<8x128xf32> to vector<8x128xbf16>
    %c6_56 = arith.constant 6 : index
    %c1_57 = arith.constant 1 : index
    %c0_58 = arith.constant 0 : index
    %c0_59 = arith.constant 0 : index
    %86 = vector.load %arg5[%c6_56, %c1_57, %c0_58, %c0_59] : memref<8x2x8x128xbf16, #tpu.memory_space<vmem>>, vector<1x1x8x128xbf16>
    %87 = vector.shape_cast %86 : vector<1x1x8x128xbf16> to vector<8x128xbf16>
    %88 = vector.shape_cast %85 : vector<8x128xbf16> to vector<1x1x8x128xbf16>
    tpu.vector_store %arg5[%c6_56, %c1_57, %c0_58, %c0_59], %88 {strides = array<i32>} : memref<8x2x8x128xbf16, #tpu.memory_space<vmem>>, vector<1x1x8x128xbf16>,
    %89 = vector.extract_strided_slice %53 {offsets = [56, 0], sizes = [8, 128], strides = [1, 1]} : vector<64x128xf32> to vector<8x128xf32>
    %90 = arith.truncf %89 : vector<8x128xf32> to vector<8x128xbf16>
    %c7_60 = arith.constant 7 : index
    %c1_61 = arith.constant 1 : index
    %c0_62 = arith.constant 0 : index
    %c0_63 = arith.constant 0 : index
    %91 = vector.load %arg5[%c7_60, %c1_61, %c0_62, %c0_63] : memref<8x2x8x128xbf16, #tpu.memory_space<vmem>>, vector<1x1x8x128xbf16>
    %92 = vector.shape_cast %91 : vector<1x1x8x128xbf16> to vector<8x128xbf16>
    %93 = vector.shape_cast %90 : vector<8x128xbf16> to vector<1x1x8x128xbf16>
    tpu.vector_store %arg5[%c7_60, %c1_61, %c0_62, %c0_63], %93 {strides = array<i32>} : memref<8x2x8x128xbf16, #tpu.memory_space<vmem>>, vector<1x1x8x128xbf16>,
    return
  }
  func.func @transform_0(%arg0: i32) -> (i32, i32) {
    %c0_i32 = arith.constant 0 : i32
    %c0_i32_0 = arith.constant 0 : i32
    return %arg0, %c0_i32 : i32, i32
  }
  func.func @transform_1(%arg0: i32) -> (i32, i32) {
    %c0_i32 = arith.constant 0 : i32
    %c0_i32_0 = arith.constant 0 : i32
    %c0_i32_1 = arith.constant 0 : i32
    return %c0_i32, %c0_i32_0 : i32, i32
  }
  func.func @transform_2(%arg0: i32) -> (i32, i32) {
    %c0_i32 = arith.constant 0 : i32
    %c0_i32_0 = arith.constant 0 : i32
    %c0_i32_1 = arith.constant 0 : i32
    return %c0_i32, %c0_i32_0 : i32, i32
  }
  func.func @transform_3(%arg0: i32) -> i32 {
    %c0_i32 = arith.constant 0 : i32
    %c0_i32_0 = arith.constant 0 : i32
    return %c0_i32 : i32
  }
  func.func @transform_4(%arg0: i32) -> (i32, i32, i32, i32) {
    %c0_i32 = arith.constant 0 : i32
    %c0_i32_0 = arith.constant 0 : i32
    %c0_i32_1 = arith.constant 0 : i32
    %c0_i32_2 = arith.constant 0 : i32
    return %arg0, %c0_i32, %c0_i32_0, %c0_i32_1 : i32, i32, i32, i32
  }
}

</mosaic_0001>

<llo_original>
// kernel: tpu_custom_call.1
$region0: #{tpu_custom_call.1}
  #allocation0 [shape = 'u32[]', space=smem, size = 0x4, offset = 0x4, fixed_abs, tag = 'smem constant byte address 0x4 - core index']
  #allocation1 [shape = 'u32[144,128]{1,0:T(1,128)}', space=vmem, size = 0x12000, scoped, tag = 'internal scratch']
  #allocation2 [shape = 'f32[1]{0:T(128)S(6)}', space=smem, size = 0x200, scoped, tag = 'scoped memory for tpu_custom_call.1']
  %s0 = inlined_call_operand.hbm [shape: bf16[64,576], index: 0, kind: input, shape index: {}]
  %s1 = inlined_call_operand.hbm [shape: bf16[576,256], index: 1, kind: input, shape index: {}]
  %s2 = inlined_call_operand.vmem [shape: f32[1,256], index: 2, kind: input, shape index: {}]
  %s3 = inlined_call_operand.<no memory space> [shape: f32[1], index: 3, kind: input, shape index: {}]
  %s4 = inlined_call_operand.hbm [shape: bf16[8,2,8,128], index: 4, kind: output, shape index: {}]
  %s5 = sld [smem:[#allocation0]]
  $region34: #{tpu_custom_call.1} parent=0
    _
  %s7 = ssub.s32 1, %s5
  %s8 = scalar_select 0, %s7, %s5
  %9 = sst [smem:[#allocation2]] %s3
  $region1: #{tpu_custom_call.1} parent=0
    #allocation3 [shape = 'u8[81920]{0}', space=vmem, size = 0x14000, scoped, tag = 'input window, operand 0, single buffered']
    #allocation4 [shape = 's32[1]{0}', space=sflag, size = 0x4, scoped, tag = 'scoped memory for tpu_custom_call.1']
    #allocation5 [shape = 's32[1]{0}', space=sflag, size = 0x4, scoped, tag = 'scoped memory for tpu_custom_call.1']
    #allocation6 [shape = 'u8[294912]{0}', space=vmem, size = 0x48000, scoped, tag = 'input window, operand 1, single buffered']
    #allocation7 [shape = 's32[1]{0}', space=sflag, size = 0x4, scoped, tag = 'scoped memory for tpu_custom_call.1']
    #allocation8 [shape = 'u8[32768]{0}', space=vmem, size = 0x8000, scoped, tag = 'output window, operand 0, single buffered']
    %10 = vsyncpa [#allocation4], 0
    %11 = vsyncpa [#allocation7], 0
    %12 = vsyncpa [#allocation5], 0
    // Predicated region
    $region2: #{tpu_custom_call.1} parent=1 // pred_check
      _
    $region3: #{tpu_custom_call.1} parent=1 // pred_check_branch
      %14 = sbr.rel (0) target = $region5
    $region4: #{tpu_custom_call.1} parent=1 // pred_region
      %s16 = ssub.s32 2560, 2560
      %17 = vsyncadd [#allocation4], %s16
      %s18 = sshll.u32 [#allocation3], 4
      %s19 = int_to_ptr.vmem [resolvable:$true] %s18
      %24 = dma.hbm_to_vmem [thread:$0]  %s0, 2560, %s19, [#allocation4], 320, 320, 20
    $region5: #{tpu_custom_call.1} parent=1 // pred_fallthru
      _
    // Predicated region
    $region6: #{tpu_custom_call.1} parent=1 // pred_check
      _
    $region7: #{tpu_custom_call.1} parent=1 // pred_check_branch
      %26 = sbr.rel (0) target = $region9
    $region8: #{tpu_custom_call.1} parent=1 // pred_region
      %s28 = ssub.s32 9216, 9216
      %29 = vsyncadd [#allocation7], %s28
      %s30 = sshll.u32 [#allocation6], 4
      %s31 = int_to_ptr.vmem [resolvable:$true] %s30
      %36 = dma.hbm_to_vmem [thread:$0]  %s1, 9216, %s31, [#allocation7], 128, 128, 8
    $region9: #{tpu_custom_call.1} parent=1 // pred_fallthru
      _
    // Predicated region
    $region10: #{tpu_custom_call.1} parent=1 // pred_check
      _
    $region11: #{tpu_custom_call.1} parent=1 // pred_check_branch
      %38 = sbr.rel (0) target = $region13
    $region12: #{tpu_custom_call.1} parent=1 // pred_region
      _
    $region13: #{tpu_custom_call.1} parent=1 // pred_fallthru
      _
    // Predicated region
    $region14: #{tpu_custom_call.1} parent=1 // pred_check
      _
    $region15: #{tpu_custom_call.1} parent=1 // pred_check_branch
      %40 = sbr.rel (0) target = $region17
    $region16: #{tpu_custom_call.1} parent=1 // pred_region
      _
    $region17: #{tpu_custom_call.1} parent=1 // pred_fallthru
      _
    // Predicated region
    $region18: #{tpu_custom_call.1} parent=1 // pred_check
      _
    $region19: #{tpu_custom_call.1} parent=1 // pred_check_branch
      %42 = sbr.rel (0) target = $region21
    $region20: #{tpu_custom_call.1} parent=1 // pred_region
      %43 = dma.done [#allocation4], 2560
    $region21: #{tpu_custom_call.1} parent=1 // pred_fallthru
      _
    // Predicated region
    $region22: #{tpu_custom_call.1} parent=1 // pred_check
      _
    $region23: #{tpu_custom_call.1} parent=1 // pred_check_branch
      %45 = sbr.rel (0) target = $region25
    $region24: #{tpu_custom_call.1} parent=1 // pred_region
      %46 = dma.done [#allocation7], 9216
    $region25: #{tpu_custom_call.1} parent=1 // pred_fallthru
      _
    %v48 = vld [vmem:[#allocation3] sm:$0xff]
    %v49 = vld [vmem:[#allocation3 + $0x8] sm:$0xff]
    %v50 = vld [vmem:[#allocation3 + $0x10] sm:$0xf]
    %v51 = vld [vmem:[#allocation3 + $0x14] sm:$0xff]
    %v52 = vld [vmem:[#allocation3 + $0x1c] sm:$0xff]
    %v53 = vld [vmem:[#allocation3 + $0x24] sm:$0xf]
    %v54 = vld [vmem:[#allocation3 + $0x28] sm:$0xff]
    %v55 = vld [vmem:[#allocation3 + $0x30] sm:$0xff]
    %v56 = vld [vmem:[#allocation3 + $0x38] sm:$0xf]
    %v57 = vld [vmem:[#allocation3 + $0x3c] sm:$0xff]
    %v58 = vld [vmem:[#allocation3 + $0x44] sm:$0xff]
    %v59 = vld [vmem:[#allocation3 + $0x4c] sm:$0xf]
    %v60 = vld [vmem:[#allocation3 + $0x50] sm:$0xff]
    %v61 = vld [vmem:[#allocation3 + $0x58] sm:$0xff]
    %v62 = vld [vmem:[#allocation3 + $0x60] sm:$0xf]
    %v63 = vld [vmem:[#allocation3 + $0x64] sm:$0xff]
    %v64 = vld [vmem:[#allocation3 + $0x6c] sm:$0xff]
    %v65 = vld [vmem:[#allocation3 + $0x74] sm:$0xf]
    %v66 = vld [vmem:[#allocation3 + $0x78] sm:$0xff]
    %v67 = vld [vmem:[#allocation3 + $0x80] sm:$0xff]
    %v68 = vld [vmem:[#allocation3 + $0x88] sm:$0xf]
    %v69 = vld [vmem:[#allocation3 + $0x8c] sm:$0xff]
    %v70 = vld [vmem:[#allocation3 + $0x94] sm:$0xff]
    %v71 = vld [vmem:[#allocation3 + $0x9c] sm:$0xf]
    %v72 = vld [vmem:[#allocation6] sm:$0xff]
    %v73 = vld [vmem:[#allocation6 + $0x8] sm:$0xff]
    %v74 = vld [vmem:[#allocation6 + $0x10] sm:$0xff]
    %v75 = vld [vmem:[#allocation6 + $0x18] sm:$0xff]
    %v76 = vld [vmem:[#allocation6 + $0x20] sm:$0xff]
    %v77 = vld [vmem:[#allocation6 + $0x28] sm:$0xff]
    %v78 = vld [vmem:[#allocation6 + $0x30] sm:$0xff]
    %v79 = vld [vmem:[#allocation6 + $0x38] sm:$0xff]
    %v80 = vld [vmem:[#allocation6 + $0x40] sm:$0xff]
    %v81 = vld [vmem:[#allocation6 + $0x48] sm:$0xff]
    %v82 = vld [vmem:[#allocation6 + $0x50] sm:$0xff]
    %v83 = vld [vmem:[#allocation6 + $0x58] sm:$0xff]
    %v84 = vld [vmem:[#allocation6 + $0x60] sm:$0xff]
    %v85 = vld [vmem:[#allocation6 + $0x68] sm:$0xff]
    %v86 = vld [vmem:[#allocation6 + $0x70] sm:$0xff]
    %v87 = vld [vmem:[#allocation6 + $0x78] sm:$0xff]
    %v88 = vld [vmem:[#allocation6 + $0x80] sm:$0xff]
    %v89 = vld [vmem:[#allocation6 + $0x88] sm:$0xff]
    %v90 = vld [vmem:[#allocation6 + $0x90] sm:$0xff]
    %v91 = vld [vmem:[#allocation6 + $0x98] sm:$0xff]
    %v92 = vld [vmem:[#allocation6 + $0xa0] sm:$0xff]
    %v93 = vld [vmem:[#allocation6 + $0xa8] sm:$0xff]
    %v94 = vld [vmem:[#allocation6 + $0xb0] sm:$0xff]
    %v95 = vld [vmem:[#allocation6 + $0xb8] sm:$0xff]
    %v96 = vld [vmem:[#allocation6 + $0xc0] sm:$0xff]
    %v97 = vld [vmem:[#allocation6 + $0xc8] sm:$0xff]
    %v98 = vld [vmem:[#allocation6 + $0xd0] sm:$0xff]
    %v99 = vld [vmem:[#allocation6 + $0xd8] sm:$0xff]
    %v100 = vld [vmem:[#allocation6 + $0xe0] sm:$0xff]
    %v101 = vld [vmem:[#allocation6 + $0xe8] sm:$0xff]
    %v102 = vld [vmem:[#allocation6 + $0xf0] sm:$0xff]
    %v103 = vld [vmem:[#allocation6 + $0xf8] sm:$0xff]
    %v104 = vld [vmem:[#allocation6 + $0x100] sm:$0xff]
    %v105 = vld [vmem:[#allocation6 + $0x108] sm:$0xff]
    %v106 = vld [vmem:[#allocation6 + $0x110] sm:$0xff]
    %v107 = vld [vmem:[#allocation6 + $0x118] sm:$0xff]
    %v108 = vld [vmem:[#allocation6 + $0x120] sm:$0xff]
    %v109 = vld [vmem:[#allocation6 + $0x128] sm:$0xff]
    %v110 = vld [vmem:[#allocation6 + $0x130] sm:$0xff]
    %v111 = vld [vmem:[#allocation6 + $0x138] sm:$0xff]
    %v112 = vld [vmem:[#allocation6 + $0x140] sm:$0xff]
    %v113 = vld [vmem:[#allocation6 + $0x148] sm:$0xff]
    %v114 = vld [vmem:[#allocation6 + $0x150] sm:$0xff]
    %v115 = vld [vmem:[#allocation6 + $0x158] sm:$0xff]
    %v116 = vld [vmem:[#allocation6 + $0x160] sm:$0xff]
    %v117 = vld [vmem:[#allocation6 + $0x168] sm:$0xff]
    %v118 = vld [vmem:[#allocation6 + $0x170] sm:$0xff]
    %v119 = vld [vmem:[#allocation6 + $0x178] sm:$0xff]
    %v120 = vld [vmem:[#allocation6 + $0x180] sm:$0xff]
    %v121 = vld [vmem:[#allocation6 + $0x188] sm:$0xff]
    %v122 = vld [vmem:[#allocation6 + $0x190] sm:$0xff]
    %v123 = vld [vmem:[#allocation6 + $0x198] sm:$0xff]
    %v124 = vld [vmem:[#allocation6 + $0x1a0] sm:$0xff]
    %v125 = vld [vmem:[#allocation6 + $0x1a8] sm:$0xff]
    %v126 = vld [vmem:[#allocation6 + $0x1b0] sm:$0xff]
    %v127 = vld [vmem:[#allocation6 + $0x1b8] sm:$0xff]
    %v128 = vld [vmem:[#allocation6 + $0x1c0] sm:$0xff]
    %v129 = vld [vmem:[#allocation6 + $0x1c8] sm:$0xff]
    %v130 = vld [vmem:[#allocation6 + $0x1d0] sm:$0xff]
    %v131 = vld [vmem:[#allocation6 + $0x1d8] sm:$0xff]
    %v132 = vld [vmem:[#allocation6 + $0x1e0] sm:$0xff]
    %v133 = vld [vmem:[#allocation6 + $0x1e8] sm:$0xff]
    %v134 = vld [vmem:[#allocation6 + $0x1f0] sm:$0xff]
    %v135 = vld [vmem:[#allocation6 + $0x1f8] sm:$0xff]
    %v136 = vld [vmem:[#allocation6 + $0x200] sm:$0xff]
    %v137 = vld [vmem:[#allocation6 + $0x208] sm:$0xff]
    %v138 = vld [vmem:[#allocation6 + $0x210] sm:$0xff]
    %v139 = vld [vmem:[#allocation6 + $0x218] sm:$0xff]
    %v140 = vld [vmem:[#allocation6 + $0x220] sm:$0xff]
    %v141 = vld [vmem:[#allocation6 + $0x228] sm:$0xff]
    %v142 = vld [vmem:[#allocation6 + $0x230] sm:$0xff]
    %v143 = vld [vmem:[#allocation6 + $0x238] sm:$0xff]
    %v144 = vld [vmem:[%s2] sm:$0x3]
    %v146 = vlaneseq
    %v147 = vshrl.u32 %v146, 7
    %v148 = vsub.s32 0, %v147
    %v149 = vrot.slane %v144, %v148
    %v150 = vlaneseq
    %v151 = vshrl.u32 %v150, 7
    %v152 = vsub.s32 1, %v151
    %v153 = vrot.slane %v144, %v152
    %v180 = vunpack.c.l.b16 %v48
    %v181 = vunpack.c.h.b16 %v48
    %v182 = vunpack.c.l.b16 %v49
    %v183 = vunpack.c.h.b16 %v49
    %v184 = vunpack.c.l.b16 %v50
    %v185 = vunpack.c.l.b16 %v51
    %v186 = vunpack.c.h.b16 %v51
    %v187 = vunpack.c.l.b16 %v52
    %v188 = vunpack.c.h.b16 %v52
    %v189 = vunpack.c.l.b16 %v53
    %v190 = vunpack.c.l.b16 %v54
    %v191 = vunpack.c.h.b16 %v54
    %v192 = vunpack.c.l.b16 %v55
    %v193 = vunpack.c.h.b16 %v55
    %v194 = vunpack.c.l.b16 %v56
    %v195 = vunpack.c.l.b16 %v57
    %v196 = vunpack.c.h.b16 %v57
    %v197 = vunpack.c.l.b16 %v58
    %v198 = vunpack.c.h.b16 %v58
    %v199 = vunpack.c.l.b16 %v59
    %v200 = vunpack.c.l.b16 %v60
    %v201 = vunpack.c.h.b16 %v60
    %v202 = vunpack.c.l.b16 %v61
    %v203 = vunpack.c.h.b16 %v61
    %v204 = vunpack.c.l.b16 %v62
    %v205 = vunpack.c.l.b16 %v63
    %v206 = vunpack.c.h.b16 %v63
    %v207 = vunpack.c.l.b16 %v64
    %v208 = vunpack.c.h.b16 %v64
    %v209 = vunpack.c.l.b16 %v65
    %v210 = vunpack.c.l.b16 %v66
    %v211 = vunpack.c.h.b16 %v66
    %v212 = vunpack.c.l.b16 %v67
    %v213 = vunpack.c.h.b16 %v67
    %v214 = vunpack.c.l.b16 %v68
    %v215 = vunpack.c.l.b16 %v69
    %v216 = vunpack.c.h.b16 %v69
    %v217 = vunpack.c.l.b16 %v70
    %v218 = vunpack.c.h.b16 %v70
    %v219 = vunpack.c.l.b16 %v71
    %v220 = vpack.c.b16 %v185, %v180
    %v221 = vpack.c.b16 %v186, %v181
    %v222 = vpack.c.b16 %v187, %v182
    %v223 = vpack.c.b16 %v188, %v183
    %v224 = vpack.c.b16 %v189, %v184
    %v225 = vpack.c.b16 %v195, %v190
    %v226 = vpack.c.b16 %v196, %v191
    %v227 = vpack.c.b16 %v197, %v192
    %v228 = vpack.c.b16 %v198, %v193
    %v229 = vpack.c.b16 %v199, %v194
    %v230 = vpack.c.b16 %v205, %v200
    %v231 = vpack.c.b16 %v206, %v201
    %v232 = vpack.c.b16 %v207, %v202
    %v233 = vpack.c.b16 %v208, %v203
    %v234 = vpack.c.b16 %v209, %v204
    %v235 = vpack.c.b16 %v215, %v210
    %v236 = vpack.c.b16 %v216, %v211
    %v237 = vpack.c.b16 %v217, %v212
    %v238 = vpack.c.b16 %v218, %v213
    %v239 = vpack.c.b16 %v219, %v214
    %v328 = vunpack.c.l.b16 %v72
    %v329 = vunpack.c.h.b16 %v72
    %v330 = vunpack.c.l.b16 %v73
    %v331 = vunpack.c.h.b16 %v73
    %v332 = vunpack.c.l.b16 %v74
    %v333 = vunpack.c.h.b16 %v74
    %v334 = vunpack.c.l.b16 %v75
    %v335 = vunpack.c.h.b16 %v75
    %v336 = vunpack.c.l.b16 %v76
    %v337 = vunpack.c.h.b16 %v76
    %v338 = vunpack.c.l.b16 %v77
    %v339 = vunpack.c.h.b16 %v77
    %v340 = vunpack.c.l.b16 %v78
    %v341 = vunpack.c.h.b16 %v78
    %v342 = vunpack.c.l.b16 %v79
    %v343 = vunpack.c.h.b16 %v79
    %v344 = vunpack.c.l.b16 %v80
    %v345 = vunpack.c.h.b16 %v80
    %v346 = vunpack.c.l.b16 %v81
    %v347 = vunpack.c.h.b16 %v81
    %v348 = vunpack.c.l.b16 %v82
    %v349 = vunpack.c.h.b16 %v82
    %v350 = vunpack.c.l.b16 %v83
    %v351 = vunpack.c.h.b16 %v83
    %v352 = vunpack.c.l.b16 %v84
    %v353 = vunpack.c.h.b16 %v84
    %v354 = vunpack.c.l.b16 %v85
    %v355 = vunpack.c.h.b16 %v85
    %v356 = vunpack.c.l.b16 %v86
    %v357 = vunpack.c.h.b16 %v86
    %v358 = vunpack.c.l.b16 %v87
    %v359 = vunpack.c.h.b16 %v87
    %v360 = vunpack.c.l.b16 %v88
    %v361 = vunpack.c.h.b16 %v88
    %v362 = vunpack.c.l.b16 %v89
    %v363 = vunpack.c.h.b16 %v89
    %v364 = vunpack.c.l.b16 %v90
    %v365 = vunpack.c.h.b16 %v90
    %v366 = vunpack.c.l.b16 %v91
    %v367 = vunpack.c.h.b16 %v91
    %v368 = vunpack.c.l.b16 %v92
    %v369 = vunpack.c.h.b16 %v92
    %v370 = vunpack.c.l.b16 %v93
    %v371 = vunpack.c.h.b16 %v93
    %v372 = vunpack.c.l.b16 %v94
    %v373 = vunpack.c.h.b16 %v94
    %v374 = vunpack.c.l.b16 %v95
    %v375 = vunpack.c.h.b16 %v95
    %v376 = vunpack.c.l.b16 %v96
    %v377 = vunpack.c.h.b16 %v96
    %v378 = vunpack.c.l.b16 %v97
    %v379 = vunpack.c.h.b16 %v97
    %v380 = vunpack.c.l.b16 %v98
    %v381 = vunpack.c.h.b16 %v98
    %v382 = vunpack.c.l.b16 %v99
    %v383 = vunpack.c.h.b16 %v99
    %v384 = vunpack.c.l.b16 %v100
    %v385 = vunpack.c.h.b16 %v100
    %v386 = vunpack.c.l.b16 %v101
    %v387 = vunpack.c.h.b16 %v101
    %v388 = vunpack.c.l.b16 %v102
    %v389 = vunpack.c.h.b16 %v102
    %v390 = vunpack.c.l.b16 %v103
    %v391 = vunpack.c.h.b16 %v103
    %v392 = vunpack.c.l.b16 %v104
    %v393 = vunpack.c.h.b16 %v104
    %v394 = vunpack.c.l.b16 %v105
    %v395 = vunpack.c.h.b16 %v105
    %v396 = vunpack.c.l.b16 %v106
    %v397 = vunpack.c.h.b16 %v106
    %v398 = vunpack.c.l.b16 %v107
    %v399 = vunpack.c.h.b16 %v107
    %v400 = vunpack.c.l.b16 %v108
    %v401 = vunpack.c.h.b16 %v108
    %v402 = vunpack.c.l.b16 %v109
    %v403 = vunpack.c.h.b16 %v109
    %v404 = vunpack.c.l.b16 %v110
    %v405 = vunpack.c.h.b16 %v110
    %v406 = vunpack.c.l.b16 %v111
    %v407 = vunpack.c.h.b16 %v111
    %v408 = vunpack.c.l.b16 %v112
    %v409 = vunpack.c.h.b16 %v112
    %v410 = vunpack.c.l.b16 %v113
    %v411 = vunpack.c.h.b16 %v113
    %v412 = vunpack.c.l.b16 %v114
    %v413 = vunpack.c.h.b16 %v114
    %v414 = vunpack.c.l.b16 %v115
    %v415 = vunpack.c.h.b16 %v115
    %v416 = vunpack.c.l.b16 %v116
    %v417 = vunpack.c.h.b16 %v116
    %v418 = vunpack.c.l.b16 %v117
    %v419 = vunpack.c.h.b16 %v117
    %v420 = vunpack.c.l.b16 %v118
    %v421 = vunpack.c.h.b16 %v118
    %v422 = vunpack.c.l.b16 %v119
    %v423 = vunpack.c.h.b16 %v119
    %v424 = vunpack.c.l.b16 %v120
    %v425 = vunpack.c.h.b16 %v120
    %v426 = vunpack.c.l.b16 %v121
    %v427 = vunpack.c.h.b16 %v121
    %v428 = vunpack.c.l.b16 %v122
    %v429 = vunpack.c.h.b16 %v122
    %v430 = vunpack.c.l.b16 %v123
    %v431 = vunpack.c.h.b16 %v123
    %v432 = vunpack.c.l.b16 %v124
    %v433 = vunpack.c.h.b16 %v124
    %v434 = vunpack.c.l.b16 %v125
    %v435 = vunpack.c.h.b16 %v125
    %v436 = vunpack.c.l.b16 %v126
    %v437 = vunpack.c.h.b16 %v126
    %v438 = vunpack.c.l.b16 %v127
    %v439 = vunpack.c.h.b16 %v127
    %v440 = vunpack.c.l.b16 %v128
    %v441 = vunpack.c.h.b16 %v128
    %v442 = vunpack.c.l.b16 %v129
    %v443 = vunpack.c.h.b16 %v129
    %v444 = vunpack.c.l.b16 %v130
    %v445 = vunpack.c.h.b16 %v130
    %v446 = vunpack.c.l.b16 %v131
    %v447 = vunpack.c.h.b16 %v131
    %v448 = vunpack.c.l.b16 %v132
    %v449 = vunpack.c.h.b16 %v132
    %v450 = vunpack.c.l.b16 %v133
    %v451 = vunpack.c.h.b16 %v133
    %v452 = vunpack.c.l.b16 %v134
    %v453 = vunpack.c.h.b16 %v134
    %v454 = vunpack.c.l.b16 %v135
    %v455 = vunpack.c.h.b16 %v135
    %v456 = vunpack.c.l.b16 %v136
    %v457 = vunpack.c.h.b16 %v136
    %v458 = vunpack.c.l.b16 %v137
    %v459 = vunpack.c.h.b16 %v137
    %v460 = vunpack.c.l.b16 %v138
    %v461 = vunpack.c.h.b16 %v138
    %v462 = vunpack.c.l.b16 %v139
    %v463 = vunpack.c.h.b16 %v139
    %v464 = vunpack.c.l.b16 %v140
    %v465 = vunpack.c.h.b16 %v140
    %v466 = vunpack.c.l.b16 %v141
    %v467 = vunpack.c.h.b16 %v141
    %v468 = vunpack.c.l.b16 %v142
    %v469 = vunpack.c.h.b16 %v142
    %v470 = vunpack.c.l.b16 %v143
    %v471 = vunpack.c.h.b16 %v143
    %v472 = vpack.c.b16 %v330, %v328
    %v473 = vpack.c.b16 %v331, %v329
    %v474 = vpack.c.b16 %v334, %v332
    %v475 = vpack.c.b16 %v335, %v333
    %v476 = vpack.c.b16 %v338, %v336
    %v477 = vpack.c.b16 %v339, %v337
    %v478 = vpack.c.b16 %v342, %v340
    %v479 = vpack.c.b16 %v343, %v341
    %v480 = vpack.c.b16 %v346, %v344
    %v481 = vpack.c.b16 %v347, %v345
    %v482 = vpack.c.b16 %v350, %v348
    %v483 = vpack.c.b16 %v351, %v349
    %v484 = vpack.c.b16 %v354, %v352
    %v485 = vpack.c.b16 %v355, %v353
    %v486 = vpack.c.b16 %v358, %v356
    %v487 = vpack.c.b16 %v359, %v357
    %v488 = vpack.c.b16 %v362, %v360
    %v489 = vpack.c.b16 %v363, %v361
    %v490 = vpack.c.b16 %v366, %v364
    %v491 = vpack.c.b16 %v367, %v365
    %v492 = vpack.c.b16 %v370, %v368
    %v493 = vpack.c.b16 %v371, %v369
    %v494 = vpack.c.b16 %v374, %v372
    %v495 = vpack.c.b16 %v375, %v373
    %v496 = vpack.c.b16 %v378, %v376
    %v497 = vpack.c.b16 %v379, %v377
    %v498 = vpack.c.b16 %v382, %v380
    %v499 = vpack.c.b16 %v383, %v381
    %v500 = vpack.c.b16 %v386, %v384
    %v501 = vpack.c.b16 %v387, %v385
    %v502 = vpack.c.b16 %v390, %v388
    %v503 = vpack.c.b16 %v391, %v389
    %v504 = vpack.c.b16 %v394, %v392
    %v505 = vpack.c.b16 %v395, %v393
    %v506 = vpack.c.b16 %v398, %v396
    %v507 = vpack.c.b16 %v399, %v397
    %v508 = vpack.c.b16 %v402, %v400
    %v509 = vpack.c.b16 %v403, %v401
    %v510 = vpack.c.b16 %v406, %v404
    %v511 = vpack.c.b16 %v407, %v405
    %v512 = vpack.c.b16 %v410, %v408
    %v513 = vpack.c.b16 %v411, %v409
    %v514 = vpack.c.b16 %v414, %v412
    %v515 = vpack.c.b16 %v415, %v413
    %v516 = vpack.c.b16 %v418, %v416
    %v517 = vpack.c.b16 %v419, %v417
    %v518 = vpack.c.b16 %v422, %v420
    %v519 = vpack.c.b16 %v423, %v421
    %v520 = vpack.c.b16 %v426, %v424
    %v521 = vpack.c.b16 %v427, %v425
    %v522 = vpack.c.b16 %v430, %v428
    %v523 = vpack.c.b16 %v431, %v429
    %v524 = vpack.c.b16 %v434, %v432
    %v525 = vpack.c.b16 %v435, %v433
    %v526 = vpack.c.b16 %v438, %v436
    %v527 = vpack.c.b16 %v439, %v437
    %v528 = vpack.c.b16 %v442, %v440
    %v529 = vpack.c.b16 %v443, %v441
    %v530 = vpack.c.b16 %v446, %v444
    %v531 = vpack.c.b16 %v447, %v445
    %v532 = vpack.c.b16 %v450, %v448
    %v533 = vpack.c.b16 %v451, %v449
    %v534 = vpack.c.b16 %v454, %v452
    %v535 = vpack.c.b16 %v455, %v453
    %v536 = vpack.c.b16 %v458, %v456
    %v537 = vpack.c.b16 %v459, %v457
    %v538 = vpack.c.b16 %v462, %v460
    %v539 = vpack.c.b16 %v463, %v461
    %v540 = vpack.c.b16 %v466, %v464
    %v541 = vpack.c.b16 %v467, %v465
    %v542 = vpack.c.b16 %v470, %v468
    %v543 = vpack.c.b16 %v471, %v469
    %vm616 = vcmask 523264
    %v618 = vsel %vm616, %v224, 0
    %v621 = vsel %vm616, %v229, 0
    %v624 = vsel %vm616, %v234, 0
    %v627 = vsel %vm616, %v239, 0
    %629 = vmatprep.subr.bf16.mxu0 %v487
    %630 = vmatpush1.bf16.msra.mxu0 %v486
    %631 = vmatprep.subr.bf16.mxu0 %v485
    %632 = vmatpush1.bf16.msra.mxu0 %v484
    %633 = vmatprep.subr.bf16.mxu0 %v483
    %634 = vmatpush1.bf16.msra.mxu0 %v482
    %635 = vmatprep.subr.bf16.mxu0 %v481
    %636 = vmatpush1.bf16.msra.mxu0 %v480
    %637 = vmatprep.subr.bf16.mxu0 %v479
    %638 = vmatpush1.bf16.msra.mxu0 %v478
    %639 = vmatprep.subr.bf16.mxu0 %v477
    %640 = vmatpush1.bf16.msra.mxu0 %v476
    %641 = vmatprep.subr.bf16.mxu0 %v475
    %642 = vmatpush1.bf16.msra.mxu0 %v474
    %643 = vmatprep.subr.bf16.mxu0 %v473
    %644 = vmatpush1.bf16.msra.mxu0 %v472
    %645 = vmatprep.subr.bf16.mxu0 %v503
    %646 = vmatpush2.bf16.msra.mxu0 %v502
    %647 = vmatprep.subr.bf16.mxu0 %v501
    %648 = vmatpush2.bf16.msra.mxu0 %v500
    %649 = vmatprep.subr.bf16.mxu0 %v499
    %650 = vmatpush2.bf16.msra.mxu0 %v498
    %651 = vmatprep.subr.bf16.mxu0 %v497
    %652 = vmatpush2.bf16.msra.mxu0 %v496
    %653 = vmatprep.subr.bf16.mxu0 %v495
    %654 = vmatpush2.bf16.msra.mxu0 %v494
    %655 = vmatprep.subr.bf16.mxu0 %v493
    %656 = vmatpush2.bf16.msra.mxu0 %v492
    %657 = vmatprep.subr.bf16.mxu0 %v491
    %658 = vmatpush2.bf16.msra.mxu0 %v490
    %659 = vmatprep.subr.bf16.mxu0 %v489
    %660 = vmatpush2.bf16.msra.mxu0 %v488
    %661 = vmatprep.mubr.bf16.mxu0 %v221
    %662 = vmatmul.mubr.bf16.gmra.mxu0 %v220
    %v663 = vpop.f32.mrf.mxu0
    %v664 = vadd.f32 %v149, %v663
    %v665 = vpop.f32.mrf.mxu0
    %v666 = vadd.f32 %v153, %v665
    %v667 = vpop.f32.mrf.mxu0
    %v668 = vadd.f32 %v149, %v667
    %v669 = vpop.f32.mrf.mxu0
    %v670 = vadd.f32 %v153, %v669
    %671 = vmatprep.mubr.bf16.mxu0 %v226
    %672 = vmatmul.mubr.bf16.gmra.mxu0 %v225
    %v673 = vpop.f32.mrf.mxu0
    %v674 = vadd.f32 %v149, %v673
    %v675 = vpop.f32.mrf.mxu0
    %v676 = vadd.f32 %v153, %v675
    %v677 = vpop.f32.mrf.mxu0
    %v678 = vadd.f32 %v149, %v677
    %v679 = vpop.f32.mrf.mxu0
    %v680 = vadd.f32 %v153, %v679
    %681 = vmatprep.mubr.bf16.mxu0 %v231
    %682 = vmatmul.mubr.bf16.gmra.mxu0 %v230
    %v683 = vpop.f32.mrf.mxu0
    %v684 = vadd.f32 %v149, %v683
    %v685 = vpop.f32.mrf.mxu0
    %v686 = vadd.f32 %v153, %v685
    %v687 = vpop.f32.mrf.mxu0
    %v688 = vadd.f32 %v149, %v687
    %v689 = vpop.f32.mrf.mxu0
    %v690 = vadd.f32 %v153, %v689
    %691 = vmatprep.mubr.bf16.mxu0 %v236
    %692 = vmatmul.mubr.bf16.gmra.mxu0 %v235
    %v693 = vpop.f32.mrf.mxu0
    %v694 = vadd.f32 %v149, %v693
    %v695 = vpop.f32.mrf.mxu0
    %v696 = vadd.f32 %v153, %v695
    %v697 = vpop.f32.mrf.mxu0
    %v698 = vadd.f32 %v149, %v697
    %v699 = vpop.f32.mrf.mxu0
    %v700 = vadd.f32 %v153, %v699
    %701 = vdwg.mxu0
    %702 = vmatprep.subr.bf16.mxu0 %v519
    %703 = vmatpush1.bf16.msra.mxu0 %v518
    %704 = vmatprep.subr.bf16.mxu0 %v517
    %705 = vmatpush1.bf16.msra.mxu0 %v516
    %706 = vmatprep.subr.bf16.mxu0 %v515
    %707 = vmatpush1.bf16.msra.mxu0 %v514
    %708 = vmatprep.subr.bf16.mxu0 %v513
    %709 = vmatpush1.bf16.msra.mxu0 %v512
    %710 = vmatprep.subr.bf16.mxu0 %v511
    %711 = vmatpush1.bf16.msra.mxu0 %v510
    %712 = vmatprep.subr.bf16.mxu0 %v509
    %713 = vmatpush1.bf16.msra.mxu0 %v508
    %714 = vmatprep.subr.bf16.mxu0 %v507
    %715 = vmatpush1.bf16.msra.mxu0 %v506
    %716 = vmatprep.subr.bf16.mxu0 %v505
    %717 = vmatpush1.bf16.msra.mxu0 %v504
    %718 = vmatprep.subr.bf16.mxu0 %v535
    %719 = vmatpush2.bf16.msra.mxu0 %v534
    %720 = vmatprep.subr.bf16.mxu0 %v533
    %721 = vmatpush2.bf16.msra.mxu0 %v532
    %722 = vmatprep.subr.bf16.mxu0 %v531
    %723 = vmatpush2.bf16.msra.mxu0 %v530
    %724 = vmatprep.subr.bf16.mxu0 %v529
    %725 = vmatpush2.bf16.msra.mxu0 %v528
    %726 = vmatprep.subr.bf16.mxu0 %v527
    %727 = vmatpush2.bf16.msra.mxu0 %v526
    %728 = vmatprep.subr.bf16.mxu0 %v525
    %729 = vmatpush2.bf16.msra.mxu0 %v524
    %730 = vmatprep.subr.bf16.mxu0 %v523
    %731 = vmatpush2.bf16.msra.mxu0 %v522
    %732 = vmatprep.subr.bf16.mxu0 %v521
    %733 = vmatpush2.bf16.msra.mxu0 %v520
    %734 = vmatprep.mubr.bf16.mxu0 %v223
    %735 = vmatmul.mubr.bf16.gmra.mxu0 %v222
    %v736 = vpop.f32.mrf.mxu0
    %v737 = vadd.f32 %v664, %v736
    %v738 = vpop.f32.mrf.mxu0
    %v739 = vadd.f32 %v666, %v738
    %v740 = vpop.f32.mrf.mxu0
    %v741 = vadd.f32 %v668, %v740
    %v742 = vpop.f32.mrf.mxu0
    %v743 = vadd.f32 %v670, %v742
    %744 = vmatprep.mubr.bf16.mxu0 %v228
    %745 = vmatmul.mubr.bf16.gmra.mxu0 %v227
    %v746 = vpop.f32.mrf.mxu0
    %v747 = vadd.f32 %v674, %v746
    %v748 = vpop.f32.mrf.mxu0
    %v749 = vadd.f32 %v676, %v748
    %v750 = vpop.f32.mrf.mxu0
    %v751 = vadd.f32 %v678, %v750
    %v752 = vpop.f32.mrf.mxu0
    %v753 = vadd.f32 %v680, %v752
    %754 = vmatprep.mubr.bf16.mxu0 %v233
    %755 = vmatmul.mubr.bf16.gmra.mxu0 %v232
    %v756 = vpop.f32.mrf.mxu0
    %v757 = vadd.f32 %v684, %v756
    %v758 = vpop.f32.mrf.mxu0
    %v759 = vadd.f32 %v686, %v758
    %v760 = vpop.f32.mrf.mxu0
    %v761 = vadd.f32 %v688, %v760
    %v762 = vpop.f32.mrf.mxu0
    %v763 = vadd.f32 %v690, %v762
    %764 = vmatprep.mubr.bf16.mxu0 %v238
    %765 = vmatmul.mubr.bf16.gmra.mxu0 %v237
    %v766 = vpop.f32.mrf.mxu0
    %v767 = vadd.f32 %v694, %v766
    %v768 = vpop.f32.mrf.mxu0
    %v769 = vadd.f32 %v696, %v768
    %v770 = vpop.f32.mrf.mxu0
    %v771 = vadd.f32 %v698, %v770
    %v772 = vpop.f32.mrf.mxu0
    %v773 = vadd.f32 %v700, %v772
    %774 = vdwg.mxu0
    %775 = vmatprep.subr.bf16.mxu0 0
    %776 = vmatpush1.bf16.msra.mxu0 0
    %777 = vmatprep.subr.bf16.mxu0 0
    %778 = vmatpush1.bf16.msra.mxu0 0
    %779 = vmatprep.subr.bf16.mxu0 0
    %780 = vmatpush1.bf16.msra.mxu0 0
    %781 = vmatprep.subr.bf16.mxu0 0
    %782 = vmatpush1.bf16.msra.mxu0 0
    %783 = vmatprep.subr.bf16.mxu0 %v543
    %784 = vmatpush1.bf16.msra.mxu0 %v542
    %785 = vmatprep.subr.bf16.mxu0 %v541
    %786 = vmatpush1.bf16.msra.mxu0 %v540
    %787 = vmatprep.subr.bf16.mxu0 %v539
    %788 = vmatpush1.bf16.msra.mxu0 %v538
    %789 = vmatprep.subr.bf16.mxu0 %v537
    %790 = vmatpush1.bf16.msra.mxu0 %v536
    %791 = vmatprep.subr.bf16.mxu0 0
    %792 = vmatpush2.bf16.msra.mxu0 0
    %793 = vmatprep.subr.bf16.mxu0 0
    %794 = vmatpush2.bf16.msra.mxu0 0
    %795 = vmatprep.subr.bf16.mxu0 0
    %796 = vmatpush2.bf16.msra.mxu0 0
    %797 = vmatprep.subr.bf16.mxu0 0
    %798 = vmatpush2.bf16.msra.mxu0 0
    %799 = vmatprep.subr.bf16.mxu0 0
    %800 = vmatpush2.bf16.msra.mxu0 0
    %801 = vmatprep.subr.bf16.mxu0 0
    %802 = vmatpush2.bf16.msra.mxu0 0
    %803 = vmatprep.subr.bf16.mxu0 0
    %804 = vmatpush2.bf16.msra.mxu0 0
    %805 = vmatprep.subr.bf16.mxu0 0
    %806 = vmatpush2.bf16.msra.mxu0 0
    %807 = vmatprep.mubr.bf16.mxu0 0
    %808 = vmatmul.mubr.bf16.gmra.mxu0 %v618
    %v809 = vpop.f32.mrf.mxu0
    %v810 = vadd.f32 %v737, %v809
    %v811 = vpop.f32.mrf.mxu0
    %v812 = vadd.f32 %v739, %v811
    %v813 = vpop.f32.mrf.mxu0
    %v814 = vadd.f32 %v741, %v813
    %v815 = vpop.f32.mrf.mxu0
    %v816 = vadd.f32 %v743, %v815
    %817 = vmatprep.mubr.bf16.mxu0 0
    %818 = vmatmul.mubr.bf16.gmra.mxu0 %v621
    %v819 = vpop.f32.mrf.mxu0
    %v820 = vadd.f32 %v747, %v819
    %v821 = vpop.f32.mrf.mxu0
    %v822 = vadd.f32 %v749, %v821
    %v823 = vpop.f32.mrf.mxu0
    %v824 = vadd.f32 %v751, %v823
    %v825 = vpop.f32.mrf.mxu0
    %v826 = vadd.f32 %v753, %v825
    %827 = vmatprep.mubr.bf16.mxu0 0
    %828 = vmatmul.mubr.bf16.gmra.mxu0 %v624
    %v829 = vpop.f32.mrf.mxu0
    %v830 = vadd.f32 %v757, %v829
    %v831 = vpop.f32.mrf.mxu0
    %v832 = vadd.f32 %v759, %v831
    %v833 = vpop.f32.mrf.mxu0
    %v834 = vadd.f32 %v761, %v833
    %v835 = vpop.f32.mrf.mxu0
    %v836 = vadd.f32 %v763, %v835
    %837 = vmatprep.mubr.bf16.mxu0 0
    %838 = vmatmul.mubr.bf16.gmra.mxu0 %v627
    %v839 = vpop.f32.mrf.mxu0
    %v840 = vadd.f32 %v767, %v839
    %v841 = vpop.f32.mrf.mxu0
    %v842 = vadd.f32 %v769, %v841
    %v843 = vpop.f32.mrf.mxu0
    %v844 = vadd.f32 %v771, %v843
    %v845 = vpop.f32.mrf.mxu0
    %v846 = vadd.f32 %v773, %v845
    %847 = vdwg.mxu0
    %s848 = sld [smem:[#allocation2]]
    %vm849 = vcmp.ge.f32.partialorder %v810, 0.0
    %vm850 = vcmp.ge.f32.partialorder %v812, 0.0
    %vm851 = vcmp.ge.f32.partialorder %v814, 0.0
    %vm852 = vcmp.ge.f32.partialorder %v816, 0.0
    %vm853 = vcmp.ge.f32.partialorder %v820, 0.0
    %vm854 = vcmp.ge.f32.partialorder %v822, 0.0
    %vm855 = vcmp.ge.f32.partialorder %v824, 0.0
    %vm856 = vcmp.ge.f32.partialorder %v826, 0.0
    %vm857 = vcmp.ge.f32.partialorder %v830, 0.0
    %vm858 = vcmp.ge.f32.partialorder %v832, 0.0
    %vm859 = vcmp.ge.f32.partialorder %v834, 0.0
    %vm860 = vcmp.ge.f32.partialorder %v836, 0.0
    %vm861 = vcmp.ge.f32.partialorder %v840, 0.0
    %vm862 = vcmp.ge.f32.partialorder %v842, 0.0
    %vm863 = vcmp.ge.f32.partialorder %v844, 0.0
    %vm864 = vcmp.ge.f32.partialorder %v846, 0.0
    %v865 = vstv %s848
    %v866 = vmul.f32 %v865, %v810
    %v867 = vmul.f32 %v865, %v812
    %v868 = vmul.f32 %v865, %v814
    %v869 = vmul.f32 %v865, %v816
    %v870 = vmul.f32 %v865, %v820
    %v871 = vmul.f32 %v865, %v822
    %v872 = vmul.f32 %v865, %v824
    %v873 = vmul.f32 %v865, %v826
    %v874 = vmul.f32 %v865, %v830
    %v875 = vmul.f32 %v865, %v832
    %v876 = vmul.f32 %v865, %v834
    %v877 = vmul.f32 %v865, %v836
    %v878 = vmul.f32 %v865, %v840
    %v879 = vmul.f32 %v865, %v842
    %v880 = vmul.f32 %v865, %v844
    %v881 = vmul.f32 %v865, %v846
    %v882 = vsel %vm849, %v810, %v866
    %v883 = vsel %vm850, %v812, %v867
    %v884 = vsel %vm851, %v814, %v868
    %v885 = vsel %vm852, %v816, %v869
    %v886 = vsel %vm853, %v820, %v870
    %v887 = vsel %vm854, %v822, %v871
    %v888 = vsel %vm855, %v824, %v872
    %v889 = vsel %vm856, %v826, %v873
    %v890 = vsel %vm857, %v830, %v874
    %v891 = vsel %vm858, %v832, %v875
    %v892 = vsel %vm859, %v834, %v876
    %v893 = vsel %vm860, %v836, %v877
    %v894 = vsel %vm861, %v840, %v878
    %v895 = vsel %vm862, %v842, %v879
    %v896 = vsel %vm863, %v844, %v880
    %v897 = vsel %vm864, %v846, %v881
    %v898 = vpack.c.bf16 %v882, %v882
    %899 = vst [vmem:[#allocation8] sm:$0xf] %v898
    %v900 = vpack.c.bf16 %v884, %v884
    %s901 = scalar_lea.vmem [#allocation8], 8
    %902 = vst [vmem:[%s901] sm:$0xf] %v900
    %v903 = vpack.c.bf16 %v886, %v886
    %s904 = scalar_lea.vmem [#allocation8], 16
    %905 = vst [vmem:[%s904] sm:$0xf] %v903
    %v906 = vpack.c.bf16 %v888, %v888
    %s907 = scalar_lea.vmem [#allocation8], 24
    %908 = vst [vmem:[%s907] sm:$0xf] %v906
    %v909 = vpack.c.bf16 %v890, %v890
    %s910 = scalar_lea.vmem [#allocation8], 32
    %911 = vst [vmem:[%s910] sm:$0xf] %v909
    %v912 = vpack.c.bf16 %v892, %v892
    %s913 = scalar_lea.vmem [#allocation8], 40
    %914 = vst [vmem:[%s913] sm:$0xf] %v912
    %v915 = vpack.c.bf16 %v894, %v894
    %s916 = scalar_lea.vmem [#allocation8], 48
    %917 = vst [vmem:[%s916] sm:$0xf] %v915
    %v918 = vpack.c.bf16 %v896, %v896
    %s919 = scalar_lea.vmem [#allocation8], 56
    %920 = vst [vmem:[%s919] sm:$0xf] %v918
    %v921 = vpack.c.bf16 %v883, %v883
    %s922 = scalar_lea.vmem [#allocation8], 4
    %923 = vst [vmem:[%s922] sm:$0xf] %v921
    %v924 = vpack.c.bf16 %v885, %v885
    %s925 = scalar_lea.vmem [#allocation8], 12
    %926 = vst [vmem:[%s925] sm:$0xf] %v924
    %v927 = vpack.c.bf16 %v887, %v887
    %s928 = scalar_lea.vmem [#allocation8], 20
    %929 = vst [vmem:[%s928] sm:$0xf] %v927
    %v930 = vpack.c.bf16 %v889, %v889
    %s931 = scalar_lea.vmem [#allocation8], 28
    %932 = vst [vmem:[%s931] sm:$0xf] %v930
    %v933 = vpack.c.bf16 %v891, %v891
    %s934 = scalar_lea.vmem [#allocation8], 36
    %935 = vst [vmem:[%s934] sm:$0xf] %v933
    %v936 = vpack.c.bf16 %v893, %v893
    %s937 = scalar_lea.vmem [#allocation8], 44
    %938 = vst [vmem:[%s937] sm:$0xf] %v936
    %v939 = vpack.c.bf16 %v895, %v895
    %s940 = scalar_lea.vmem [#allocation8], 52
    %941 = vst [vmem:[%s940] sm:$0xf] %v939
    %v942 = vpack.c.bf16 %v897, %v897
    %s943 = scalar_lea.vmem [#allocation8], 60
    %944 = vst [vmem:[%s943] sm:$0xf] %v942
    // Predicated region
    $region26: #{tpu_custom_call.1} parent=1 // pred_check
      _
    $region27: #{tpu_custom_call.1} parent=1 // pred_check_branch
      %946 = sbr.rel (0) target = $region29
    $region28: #{tpu_custom_call.1} parent=1 // pred_region
      %s948 = ssub.s32 1024, 1024
      %949 = vsyncadd [#allocation5], %s948
      %s950 = sshll.u32 [#allocation8], 4
      %s951 = int_to_ptr.vmem [resolvable:$true] %s950
      %956 = dma.vmem_to_hbm [thread:$0]  %s951, 1024, %s4, [#allocation5], 64, 64, 4
    $region29: #{tpu_custom_call.1} parent=1 // pred_fallthru
      _
    // Predicated region
    $region30: #{tpu_custom_call.1} parent=1 // pred_check
      _
    $region31: #{tpu_custom_call.1} parent=1 // pred_check_branch
      %958 = sbr.rel (0) target = $region33
    $region32: #{tpu_custom_call.1} parent=1 // pred_region
      %959 = dma.done [#allocation5], 1024
    $region33: #{tpu_custom_call.1} parent=1 // pred_fallthru
      _
    %960 = vsyncpa [#allocation4], 1
    %961 = vsyncpa [#allocation7], 1
    %962 = vsyncpa [#allocation5], 1

</llo_original>
